<compile_context>
chip_gen: v6e
topology: v6e:2x2x1
jax: 0.10.0
libtpu: 0.0.40
codegen_flags: <defaults>
</compile_context>

<pallas_src>
import functools

import jax
import jax.numpy as jnp
from jax.experimental import pallas as pl
from jax.experimental.pallas import tpu as pltpu

BN_EPS = 1e-5
NEG_SLOPE = 0.3  # lrelu_keras


def _pick_batch_block(n, l, c0, c1, budget_bytes=4 << 20):
  """Largest divisor of n that (a) keeps the in/out blocks (double-buffered)
  under a conservative VMEM budget (safe for v7x's 64 MiB / 32 MiB scoped
  default) and (b) leaves >= 2 grid steps so v7x megacore can split them."""
  per_sample = 8 * ((l + 2) * c0 + (l // 3) * c1)      # f32, 2x double buffer
  cap = max(1, budget_bytes // max(per_sample, 1))
  for d in range(min(n, cap), 0, -1):
    if n % d == 0 and (n // d >= 2 or n == 1):
      return d
  return 1


def _residual_block_kernel(x_ref, w1_ref, b1_ref, g2_ref, h2_ref, w2_ref,
                           b2_ref, *rest, b_blk, seq_len, lout, downsample):
  """Processes b_blk samples resident in VMEM.

  x_ref : (b_blk, L+2, C0)  input, one zero halo row on each side of L
  w1_ref: (3, C0, C1) tap-major conv1 weight        b1_ref: (1, C1)
  g2_ref/h2_ref: (1, C1) folded BN2 scale / shift
  w2_ref: (3, C1, C1) tap-major conv2 weight        b2_ref: (1, C1)
  [wd_ref: (C0, C1), bd_ref: (1, C1)]               only when downsample
  o_ref : (b_blk, Lout, C1)
  y_sc  : (L+2, C1) f32 scratch (conv2 halo buffer, then pooling staging)
  """
  if downsample:
    wd_ref, bd_ref, o_ref, y_sc = rest
  else:
    o_ref, y_sc = rest
  c1 = o_ref.shape[-1]
  zero_row = jnp.zeros((1, c1), jnp.float32)

  for b in range(b_blk):  # b_blk is small by construction (VMEM-capped)
    # conv1 taps are plain offset reads of the zero-padded input block.
    x_prev = x_ref[b, pl.ds(0, seq_len), :]          # x[l-1]
    x_mid = x_ref[b, pl.ds(1, seq_len), :]           # x[l]
    x_next = x_ref[b, pl.ds(2, seq_len), :]          # x[l+1]

    y = jnp.dot(x_prev, w1_ref[0], preferred_element_type=jnp.float32)
    y += jnp.dot(x_mid, w1_ref[1], preferred_element_type=jnp.float32)
    y += jnp.dot(x_next, w1_ref[2], preferred_element_type=jnp.float32)
    y += b1_ref[...]
    y = y * g2_ref[...] + h2_ref[...]                # BN2 (inference, folded)
    y = jnp.where(y >= 0.0, y, NEG_SLOPE * y)        # LeakyReLU(0.3)

    # Stage y with a one-row zero halo so conv2 taps are also offset reads.
    y_sc[pl.ds(0, 1), :] = zero_row
    y_sc[pl.ds(seq_len + 1, 1), :] = zero_row
    y_sc[pl.ds(1, seq_len), :] = y

    z = jnp.dot(y_sc[pl.ds(0, seq_len), :], w2_ref[0],
                preferred_element_type=jnp.float32)
    z += jnp.dot(y_sc[pl.ds(1, seq_len), :], w2_ref[1],
                 preferred_element_type=jnp.float32)
    z += jnp.dot(y_sc[pl.ds(2, seq_len), :], w2_ref[2],
                 preferred_element_type=jnp.float32)
    z += b2_ref[...]

    if downsample:
      ident = jnp.dot(x_mid, wd_ref[...],
                      preferred_element_type=jnp.float32) + bd_ref[...]
    else:
      ident = x_mid
    r = z + ident                                    # (L, C1) residual sum

    # MaxPool1d(kernel=3, stride=3): stage r, then three sublane-strided reads
    # (rows k, k+3, ...) and a VPU max.  Rows >= 3*lout are ignored, matching
    # PyTorch's truncation when L % 3 != 0.
    y_sc[pl.ds(0, seq_len), :] = r
    p = jnp.maximum(
        jnp.maximum(y_sc[pl.ds(0, lout, 3), :], y_sc[pl.ds(1, lout, 3), :]),
        y_sc[pl.ds(2, lout, 3), :])
    o_ref[b] = p


def residual_block_forward(x_ncl, params):
  """x_ncl: (N, C0, L) float32  ->  (N, C1, L//3) float32."""
  n, c0, l = x_ncl.shape
  c1 = params["conv1_w"].shape[0]
  lout = l // 3
  downsample = c0 != c1

  # Channels-last + one zero halo row per side of L (conv pad=1).
  x = jnp.transpose(x_ncl, (0, 2, 1)).astype(jnp.float32)        # (N, L, C0)
  x_pad = jnp.pad(x, ((0, 0), (1, 1), (0, 0)))                   # (N, L+2, C0)

  # torch Conv1d weight (Cout, Cin, K) -> tap-major (K, Cin, Cout)
  w1 = jnp.transpose(params["conv1_w"], (2, 1, 0)).astype(jnp.float32)
  w2 = jnp.transpose(params["conv2_w"], (2, 1, 0)).astype(jnp.float32)
  b1 = params["conv1_b"].reshape(1, c1).astype(jnp.float32)
  b2 = params["conv2_b"].reshape(1, c1).astype(jnp.float32)

  # Fold inference-mode BatchNorm1d into per-channel scale/shift (glue).
  scale2 = params["bn2_gamma"] / jnp.sqrt(params["bn2_var"] + BN_EPS)
  shift2 = params["bn2_beta"] - params["bn2_mean"] * scale2
  scale2 = scale2.reshape(1, c1).astype(jnp.float32)
  shift2 = shift2.reshape(1, c1).astype(jnp.float32)

  b_blk = _pick_batch_block(n, l, c0, c1)
  grid = (n // b_blk,)

  full3 = lambda shape: pl.BlockSpec(shape, lambda i: (0, 0, 0))
  full2 = lambda shape: pl.BlockSpec(shape, lambda i: (0, 0))

  in_arrays = [x_pad, w1, b1, scale2, shift2, w2, b2]
  in_specs = [
      pl.BlockSpec((b_blk, l + 2, c0), lambda i: (i, 0, 0)),
      full3((3, c0, c1)),
      full2((1, c1)),
      full2((1, c1)),
      full2((1, c1)),
      full3((3, c1, c1)),
      full2((1, c1)),
  ]
  if downsample:
    wd = jnp.transpose(params["convd_w"][:, :, 0], (1, 0)).astype(jnp.float32)
    bd = params["convd_b"].reshape(1, c1).astype(jnp.float32)
    in_arrays += [wd, bd]
    in_specs += [full2((c0, c1)), full2((1, c1))]

  flops_per_sample = (2 * l * 3 * c0 * c1 + 2 * l * 3 * c1 * c1
                      + (2 * l * c0 * c1 if downsample else 0)
                      + 8 * l * c1)
  weight_bytes = 4 * sum(int(a.size) for a in in_arrays[1:])
  cost = pl.CostEstimate(
      flops=int(n * flops_per_sample),
      transcendentals=0,
      bytes_accessed=int(4 * (x_pad.size + n * lout * c1) + weight_bytes))

  out = pl.pallas_call(
      functools.partial(_residual_block_kernel, b_blk=b_blk, seq_len=l,
                        lout=lout, downsample=downsample),
      grid=grid,
      in_specs=in_specs,
      out_specs=pl.BlockSpec((b_blk, lout, c1), lambda i: (i, 0, 0)),
      out_shape=jax.ShapeDtypeStruct((n, lout, c1), jnp.float32),
      scratch_shapes=[pltpu.VMEM((l + 2, c1), jnp.float32)],
      compiler_params=pltpu.CompilerParams(dimension_semantics=("parallel",)),
      cost_estimate=cost,
  )(*in_arrays)

  return jnp.transpose(out, (0, 2, 1))                           # (N, C1, Lout)


def residual_block_reference(x_ncl, params):
  """Pure-JAX reference (mirrors PyTorch eval-mode forward)."""
  def conv1d(x, w, b, pad):
    y = jax.lax.conv_general_dilated(
        x, w, window_strides=(1,), padding=[(pad, pad)],
        dimension_numbers=("NCH", "OIH", "NCH"))
    return y + b[None, :, None]

  c0 = x_ncl.shape[1]
  c1 = params["conv1_w"].shape[0]
  y = conv1d(x_ncl, params["conv1_w"], params["conv1_b"], 1)
  scale = params["bn2_gamma"] / jnp.sqrt(params["bn2_var"] + BN_EPS)
  shift = params["bn2_beta"] - params["bn2_mean"] * scale
  y = y * scale[None, :, None] + shift[None, :, None]
  y = jnp.where(y >= 0, y, NEG_SLOPE * y)
  y = conv1d(y, params["conv2_w"], params["conv2_b"], 1)
  ident = x_ncl
  if c0 != c1:
    ident = conv1d(x_ncl, params["convd_w"], params["convd_b"], 0)
  y = y + ident
  n, c, l = y.shape
  lout = l // 3
  return jnp.max(y[:, :, : lout * 3].reshape(n, c, lout, 3), axis=-1)


def init_params(key, c0, c1):
  ks = jax.random.split(key, 10)
  return {
      "conv1_w": 0.2 * jax.random.normal(ks[0], (c1, c0, 3), jnp.float32),
      "conv1_b": 0.1 * jax.random.normal(ks[1], (c1,), jnp.float32),
      "conv2_w": 0.2 * jax.random.normal(ks[2], (c1, c1, 3), jnp.float32),
      "conv2_b": 0.1 * jax.random.normal(ks[3], (c1,), jnp.float32),
      "convd_w": 0.2 * jax.random.normal(ks[4], (c1, c0, 1), jnp.float32),
      "convd_b": 0.1 * jax.random.normal(ks[5], (c1,), jnp.float32),
      "bn2_gamma": 1.0 + 0.1 * jax.random.normal(ks[6], (c1,), jnp.float32),
      "bn2_beta": 0.1 * jax.random.normal(ks[7], (c1,), jnp.float32),
      "bn2_mean": 0.1 * jax.random.normal(ks[8], (c1,), jnp.float32),
      "bn2_var": jnp.abs(1.0 + 0.1 * jax.random.normal(ks[9], (c1,),
                                                       jnp.float32)),
  }


if __name__ == "__main__":
  key = jax.random.PRNGKey(0)
  kx, kp, kx2, kp2 = jax.random.split(key, 4)

  # Test 1: downsample path (nb_filts = [4, 8]), one sample per grid step.
  n, c0, c1, seq_len = 2, 4, 8, 24
  x = jax.random.normal(kx, (n, c0, seq_len), jnp.float32)
  params = init_params(kp, c0, c1)
  out = jax.block_until_ready(residual_block_forward(x, params))
  ref = residual_block_reference(x, params)
  assert out.shape == (n, c1, seq_len // 3), out.shape
  assert jnp.allclose(out, ref, rtol=1e-4, atol=1e-4), \
      float(jnp.max(jnp.abs(out - ref)))

  # Test 2: identity path (nb_filts = [8, 8]) with batch-blocked grid
  # (N=4 -> 2 samples per grid step, 2 parallel grid steps).
  n2, c2 = 4, 8
  x2 = jax.random.normal(kx2, (n2, c2, seq_len), jnp.float32)
  params2 = init_params(kp2, c2, c2)
  out2 = jax.block_until_ready(residual_block_forward(x2, params2))
  ref2 = residual_block_reference(x2, params2)
  assert out2.shape == (n2, c2, seq_len // 3), out2.shape
  assert jnp.allclose(out2, ref2, rtol=1e-4, atol=1e-4), \
      float(jnp.max(jnp.abs(out2 - ref2)))

  print("KERNEL_OK")
</pallas_src>

<mosaic_0001>
module attributes {stable_mosaic.version = 11 : i64} {
  func.func @_residual_block_kernel(%arg0: i32, %arg1: memref<1x26x4xf32, #tpu.memory_space<vmem>>, %arg2: memref<3x4x8xf32, #tpu.memory_space<vmem>>, %arg3: memref<1x8xf32, #tpu.memory_space<vmem>>, %arg4: memref<1x8xf32, #tpu.memory_space<vmem>>, %arg5: memref<1x8xf32, #tpu.memory_space<vmem>>, %arg6: memref<3x8x8xf32, #tpu.memory_space<vmem>>, %arg7: memref<1x8xf32, #tpu.memory_space<vmem>>, %arg8: memref<4x8xf32, #tpu.memory_space<vmem>>, %arg9: memref<1x8xf32, #tpu.memory_space<vmem>>, %arg10: memref<1x8x8xf32, #tpu.memory_space<vmem>>, %arg11: memref<26x8xf32, #tpu.memory_space<vmem>>) attributes {dimension_semantics = [#tpu.dimension_semantics<parallel>], iteration_bounds = array<i64: 2>, scalar_prefetch = 0 : i64, scratch_operands = 1 : i64, tpu.core_type = #tpu.core_type<tc>, window_params = [{transform_indices = @transform_0, window_bounds = array<i64: 1, 26, 4>}, {pipeline_mode = #tpu.pipeline_mode<synchronous>, transform_indices = @transform_1, window_bounds = array<i64: 3, 4, 8>}, {pipeline_mode = #tpu.pipeline_mode<synchronous>, transform_indices = @transform_2, window_bounds = array<i64: 1, 8>}, {pipeline_mode = #tpu.pipeline_mode<synchronous>, transform_indices = @transform_3, window_bounds = array<i64: 1, 8>}, {pipeline_mode = #tpu.pipeline_mode<synchronous>, transform_indices = @transform_4, window_bounds = array<i64: 1, 8>}, {pipeline_mode = #tpu.pipeline_mode<synchronous>, transform_indices = @transform_5, window_bounds = array<i64: 3, 8, 8>}, {pipeline_mode = #tpu.pipeline_mode<synchronous>, transform_indices = @transform_6, window_bounds = array<i64: 1, 8>}, {pipeline_mode = #tpu.pipeline_mode<synchronous>, transform_indices = @transform_7, window_bounds = array<i64: 4, 8>}, {pipeline_mode = #tpu.pipeline_mode<synchronous>, transform_indices = @transform_8, window_bounds = array<i64: 1, 8>}, {transform_indices = @transform_9, window_bounds = array<i64: 1, 8, 8>}]} {
    %cst = arith.constant 0.000000e+00 : f32
    %0 = vector.broadcast %cst : f32 to vector<1x8xf32>
    %c0 = arith.constant 0 : index
    %c0_0 = arith.constant 0 : index
    %c0_1 = arith.constant 0 : index
    %1 = vector.load %arg1[%c0, %c0_0, %c0_1] : memref<1x26x4xf32, #tpu.memory_space<vmem>>, vector<1x24x4xf32>
    %2 = vector.shape_cast %1 : vector<1x24x4xf32> to vector<24x4xf32>
    %c0_2 = arith.constant 0 : index
    %c1 = arith.constant 1 : index
    %c0_3 = arith.constant 0 : index
    %3 = vector.load %arg1[%c0_2, %c1, %c0_3] : memref<1x26x4xf32, #tpu.memory_space<vmem>>, vector<1x24x4xf32>
    %4 = vector.shape_cast %3 : vector<1x24x4xf32> to vector<24x4xf32>
    %c0_4 = arith.constant 0 : index
    %c2 = arith.constant 2 : index
    %c0_5 = arith.constant 0 : index
    %5 = vector.load %arg1[%c0_4, %c2, %c0_5] : memref<1x26x4xf32, #tpu.memory_space<vmem>>, vector<1x24x4xf32>
    %6 = vector.shape_cast %5 : vector<1x24x4xf32> to vector<24x4xf32>
    %c0_6 = arith.constant 0 : index
    %c0_7 = arith.constant 0 : index
    %c0_8 = arith.constant 0 : index
    %7 = vector.load %arg2[%c0_6, %c0_7, %c0_8] : memref<3x4x8xf32, #tpu.memory_space<vmem>>, vector<1x4x8xf32>
    %8 = vector.shape_cast %7 : vector<1x4x8xf32> to vector<4x8xf32>
    %cst_9 = arith.constant dense<0.000000e+00> : vector<24x8xf32>
    %9 = tpu.matmul %2, %8, %cst_9 {dimension_numbers = #tpu.dot_dimension_numbers<[1], [0], [0], [1], [0, 0, 1, 1], [], []>} : vector<24x4xf32>, vector<4x8xf32>, vector<24x8xf32> -> vector<24x8xf32>
    %c1_10 = arith.constant 1 : index
    %c0_11 = arith.constant 0 : index
    %c0_12 = arith.constant 0 : index
    %10 = vector.load %arg2[%c1_10, %c0_11, %c0_12] : memref<3x4x8xf32, #tpu.memory_space<vmem>>, vector<1x4x8xf32>
    %11 = vector.shape_cast %10 : vector<1x4x8xf32> to vector<4x8xf32>
    %cst_13 = arith.constant dense<0.000000e+00> : vector<24x8xf32>
    %12 = tpu.matmul %4, %11, %cst_13 {dimension_numbers = #tpu.dot_dimension_numbers<[1], [0], [0], [1], [0, 0, 1, 1], [], []>} : vector<24x4xf32>, vector<4x8xf32>, vector<24x8xf32> -> vector<24x8xf32>
    %13 = arith.addf %9, %12 : vector<24x8xf32>
    %c2_14 = arith.constant 2 : index
    %c0_15 = arith.constant 0 : index
    %c0_16 = arith.constant 0 : index
    %14 = vector.load %arg2[%c2_14, %c0_15, %c0_16] : memref<3x4x8xf32, #tpu.memory_space<vmem>>, vector<1x4x8xf32>
    %15 = vector.shape_cast %14 : vector<1x4x8xf32> to vector<4x8xf32>
    %cst_17 = arith.constant dense<0.000000e+00> : vector<24x8xf32>
    %16 = tpu.matmul %6, %15, %cst_17 {dimension_numbers = #tpu.dot_dimension_numbers<[1], [0], [0], [1], [0, 0, 1, 1], [], []>} : vector<24x4xf32>, vector<4x8xf32>, vector<24x8xf32> -> vector<24x8xf32>
    %17 = arith.addf %13, %16 : vector<24x8xf32>
    %c0_18 = arith.constant 0 : index
    %c0_19 = arith.constant 0 : index
    %18 = vector.load %arg3[%c0_18, %c0_19] : memref<1x8xf32, #tpu.memory_space<vmem>>, vector<1x8xf32>
    %19 = vector.broadcast %18 : vector<1x8xf32> to vector<24x8xf32>
    %20 = arith.addf %17, %19 : vector<24x8xf32>
    %c0_20 = arith.constant 0 : index
    %c0_21 = arith.constant 0 : index
    %21 = vector.load %arg4[%c0_20, %c0_21] : memref<1x8xf32, #tpu.memory_space<vmem>>, vector<1x8xf32>
    %22 = vector.broadcast %21 : vector<1x8xf32> to vector<24x8xf32>
    %23 = arith.mulf %20, %22 : vector<24x8xf32>
    %c0_22 = arith.constant 0 : index
    %c0_23 = arith.constant 0 : index
    %24 = vector.load %arg5[%c0_22, %c0_23] : memref<1x8xf32, #tpu.memory_space<vmem>>, vector<1x8xf32>
    %25 = vector.broadcast %24 : vector<1x8xf32> to vector<24x8xf32>
    %26 = arith.addf %23, %25 : vector<24x8xf32>
    %cst_24 = arith.constant 0.000000e+00 : f32
    %27 = vector.broadcast %cst_24 : f32 to vector<24x8xf32>
    %28 = arith.cmpf oge, %26, %27 : vector<24x8xf32>
    %cst_25 = arith.constant 3.000000e-01 : f32
    %29 = vector.broadcast %cst_25 : f32 to vector<24x8xf32>
    %30 = arith.mulf %29, %26 : vector<24x8xf32>
    %31 = arith.select %28, %26, %30 : vector<24x8xi1>, vector<24x8xf32>
    %c0_26 = arith.constant 0 : index
    %c0_27 = arith.constant 0 : index
    %32 = vector.load %arg11[%c0_26, %c0_27] : memref<26x8xf32, #tpu.memory_space<vmem>>, vector<1x8xf32>
    tpu.vector_store %arg11[%c0_26, %c0_27], %0 {strides = array<i32>} : memref<26x8xf32, #tpu.memory_space<vmem>>, vector<1x8xf32>,
    %c25 = arith.constant 25 : index
    %c0_28 = arith.constant 0 : index
    %33 = vector.load %arg11[%c25, %c0_28] : memref<26x8xf32, #tpu.memory_space<vmem>>, vector<1x8xf32>
    tpu.vector_store %arg11[%c25, %c0_28], %0 {strides = array<i32>} : memref<26x8xf32, #tpu.memory_space<vmem>>, vector<1x8xf32>,
    %c1_29 = arith.constant 1 : index
    %c0_30 = arith.constant 0 : index
    %34 = vector.load %arg11[%c1_29, %c0_30] : memref<26x8xf32, #tpu.memory_space<vmem>>, vector<24x8xf32>
    tpu.vector_store %arg11[%c1_29, %c0_30], %31 {strides = array<i32>} : memref<26x8xf32, #tpu.memory_space<vmem>>, vector<24x8xf32>,
    %c0_31 = arith.constant 0 : index
    %c0_32 = arith.constant 0 : index
    %35 = vector.load %arg11[%c0_31, %c0_32] : memref<26x8xf32, #tpu.memory_space<vmem>>, vector<24x8xf32>
    %c0_33 = arith.constant 0 : index
    %c0_34 = arith.constant 0 : index
    %c0_35 = arith.constant 0 : index
    %36 = vector.load %arg6[%c0_33, %c0_34, %c0_35] : memref<3x8x8xf32, #tpu.memory_space<vmem>>, vector<1x8x8xf32>
    %37 = vector.shape_cast %36 : vector<1x8x8xf32> to vector<8x8xf32>
    %cst_36 = arith.constant dense<0.000000e+00> : vector<24x8xf32>
    %38 = tpu.matmul %35, %37, %cst_36 {dimension_numbers = #tpu.dot_dimension_numbers<[1], [0], [0], [1], [0, 0, 1, 1], [], []>} : vector<24x8xf32>, vector<8x8xf32>, vector<24x8xf32> -> vector<24x8xf32>
    %c1_37 = arith.constant 1 : index
    %c0_38 = arith.constant 0 : index
    %39 = vector.load %arg11[%c1_37, %c0_38] : memref<26x8xf32, #tpu.memory_space<vmem>>, vector<24x8xf32>
    %c1_39 = arith.constant 1 : index
    %c0_40 = arith.constant 0 : index
    %c0_41 = arith.constant 0 : index
    %40 = vector.load %arg6[%c1_39, %c0_40, %c0_41] : memref<3x8x8xf32, #tpu.memory_space<vmem>>, vector<1x8x8xf32>
    %41 = vector.shape_cast %40 : vector<1x8x8xf32> to vector<8x8xf32>
    %cst_42 = arith.constant dense<0.000000e+00> : vector<24x8xf32>
    %42 = tpu.matmul %39, %41, %cst_42 {dimension_numbers = #tpu.dot_dimension_numbers<[1], [0], [0], [1], [0, 0, 1, 1], [], []>} : vector<24x8xf32>, vector<8x8xf32>, vector<24x8xf32> -> vector<24x8xf32>
    %43 = arith.addf %38, %42 : vector<24x8xf32>
    %c2_43 = arith.constant 2 : index
    %c0_44 = arith.constant 0 : index
    %44 = vector.load %arg11[%c2_43, %c0_44] : memref<26x8xf32, #tpu.memory_space<vmem>>, vector<24x8xf32>
    %c2_45 = arith.constant 2 : index
    %c0_46 = arith.constant 0 : index
    %c0_47 = arith.constant 0 : index
    %45 = vector.load %arg6[%c2_45, %c0_46, %c0_47] : memref<3x8x8xf32, #tpu.memory_space<vmem>>, vector<1x8x8xf32>
    %46 = vector.shape_cast %45 : vector<1x8x8xf32> to vector<8x8xf32>
    %cst_48 = arith.constant dense<0.000000e+00> : vector<24x8xf32>
    %47 = tpu.matmul %44, %46, %cst_48 {dimension_numbers = #tpu.dot_dimension_numbers<[1], [0], [0], [1], [0, 0, 1, 1], [], []>} : vector<24x8xf32>, vector<8x8xf32>, vector<24x8xf32> -> vector<24x8xf32>
    %48 = arith.addf %43, %47 : vector<24x8xf32>
    %c0_49 = arith.constant 0 : index
    %c0_50 = arith.constant 0 : index
    %49 = vector.load %arg7[%c0_49, %c0_50] : memref<1x8xf32, #tpu.memory_space<vmem>>, vector<1x8xf32>
    %50 = vector.broadcast %49 : vector<1x8xf32> to vector<24x8xf32>
    %51 = arith.addf %48, %50 : vector<24x8xf32>
    %c0_51 = arith.constant 0 : index
    %c0_52 = arith.constant 0 : index
    %52 = vector.load %arg8[%c0_51, %c0_52] : memref<4x8xf32, #tpu.memory_space<vmem>>, vector<4x8xf32>
    %cst_53 = arith.constant dense<0.000000e+00> : vector<24x8xf32>
    %53 = tpu.matmul %4, %52, %cst_53 {dimension_numbers = #tpu.dot_dimension_numbers<[1], [0], [0], [1], [0, 0, 1, 1], [], []>} : vector<24x4xf32>, vector<4x8xf32>, vector<24x8xf32> -> vector<24x8xf32>
    %c0_54 = arith.constant 0 : index
    %c0_55 = arith.constant 0 : index
    %54 = vector.load %arg9[%c0_54, %c0_55] : memref<1x8xf32, #tpu.memory_space<vmem>>, vector<1x8xf32>
    %55 = vector.broadcast %54 : vector<1x8xf32> to vector<24x8xf32>
    %56 = arith.addf %53, %55 : vector<24x8xf32>
    %57 = arith.addf %51, %56 : vector<24x8xf32>
    %c0_56 = arith.constant 0 : index
    %c0_57 = arith.constant 0 : index
    %58 = vector.load %arg11[%c0_56, %c0_57] : memref<26x8xf32, #tpu.memory_space<vmem>>, vector<24x8xf32>
    tpu.vector_store %arg11[%c0_56, %c0_57], %57 {strides = array<i32>} : memref<26x8xf32, #tpu.memory_space<vmem>>, vector<24x8xf32>,
    %c0_58 = arith.constant 0 : index
    %c0_59 = arith.constant 0 : index
    %59 = tpu.strided_load %arg11[%c0_58, %c0_59] {strides = array<i32: 3, 1>} : memref<26x8xf32, #tpu.memory_space<vmem>>, vector<8x8xf32>
    %c1_60 = arith.constant 1 : index
    %c0_61 = arith.constant 0 : index
    %60 = tpu.strided_load %arg11[%c1_60, %c0_61] {strides = array<i32: 3, 1>} : memref<26x8xf32, #tpu.memory_space<vmem>>, vector<8x8xf32>
    %61 = arith.maximumf %59, %60 : vector<8x8xf32>
    %c2_62 = arith.constant 2 : index
    %c0_63 = arith.constant 0 : index
    %62 = tpu.strided_load %arg11[%c2_62, %c0_63] {strides = array<i32: 3, 1>} : memref<26x8xf32, #tpu.memory_space<vmem>>, vector<8x8xf32>
    %63 = arith.maximumf %61, %62 : vector<8x8xf32>
    %c0_64 = arith.constant 0 : index
    %c0_65 = arith.constant 0 : index
    %c0_66 = arith.constant 0 : index
    %64 = vector.load %arg10[%c0_64, %c0_65, %c0_66] : memref<1x8x8xf32, #tpu.memory_space<vmem>>, vector<1x8x8xf32>
    %65 = vector.shape_cast %64 : vector<1x8x8xf32> to vector<8x8xf32>
    %66 = vector.shape_cast %63 : vector<8x8xf32> to vector<1x8x8xf32>
    tpu.vector_store %arg10[%c0_64, %c0_65, %c0_66], %66 {strides = array<i32>} : memref<1x8x8xf32, #tpu.memory_space<vmem>>, vector<1x8x8xf32>,
    return
  }
  func.func @transform_0(%arg0: i32) -> (i32, i32, i32) {
    %c0_i32 = arith.constant 0 : i32
    %c0_i32_0 = arith.constant 0 : i32
    %c0_i32_1 = arith.constant 0 : i32
    return %arg0, %c0_i32, %c0_i32_0 : i32, i32, i32
  }
  func.func @transform_1(%arg0: i32) -> (i32, i32, i32) {
    %c0_i32 = arith.constant 0 : i32
    %c0_i32_0 = arith.constant 0 : i32
    %c0_i32_1 = arith.constant 0 : i32
    %c0_i32_2 = arith.constant 0 : i32
    return %c0_i32, %c0_i32_0, %c0_i32_1 : i32, i32, i32
  }
  func.func @transform_2(%arg0: i32) -> (i32, i32) {
    %c0_i32 = arith.constant 0 : i32
    %c0_i32_0 = arith.constant 0 : i32
    %c0_i32_1 = arith.constant 0 : i32
    return %c0_i32, %c0_i32_0 : i32, i32
  }
  func.func @transform_3(%arg0: i32) -> (i32, i32) {
    %c0_i32 = arith.constant 0 : i32
    %c0_i32_0 = arith.constant 0 : i32
    %c0_i32_1 = arith.constant 0 : i32
    return %c0_i32, %c0_i32_0 : i32, i32
  }
  func.func @transform_4(%arg0: i32) -> (i32, i32) {
    %c0_i32 = arith.constant 0 : i32
    %c0_i32_0 = arith.constant 0 : i32
    %c0_i32_1 = arith.constant 0 : i32
    return %c0_i32, %c0_i32_0 : i32, i32
  }
  func.func @transform_5(%arg0: i32) -> (i32, i32, i32) {
    %c0_i32 = arith.constant 0 : i32
    %c0_i32_0 = arith.constant 0 : i32
    %c0_i32_1 = arith.constant 0 : i32
    %c0_i32_2 = arith.constant 0 : i32
    return %c0_i32, %c0_i32_0, %c0_i32_1 : i32, i32, i32
  }
  func.func @transform_6(%arg0: i32) -> (i32, i32) {
    %c0_i32 = arith.constant 0 : i32
    %c0_i32_0 = arith.constant 0 : i32
    %c0_i32_1 = arith.constant 0 : i32
    return %c0_i32, %c0_i32_0 : i32, i32
  }
  func.func @transform_7(%arg0: i32) -> (i32, i32) {
    %c0_i32 = arith.constant 0 : i32
    %c0_i32_0 = arith.constant 0 : i32
    %c0_i32_1 = arith.constant 0 : i32
    return %c0_i32, %c0_i32_0 : i32, i32
  }
  func.func @transform_8(%arg0: i32) -> (i32, i32) {
    %c0_i32 = arith.constant 0 : i32
    %c0_i32_0 = arith.constant 0 : i32
    %c0_i32_1 = arith.constant 0 : i32
    return %c0_i32, %c0_i32_0 : i32, i32
  }
  func.func @transform_9(%arg0: i32) -> (i32, i32, i32) {
    %c0_i32 = arith.constant 0 : i32
    %c0_i32_0 = arith.constant 0 : i32
    %c0_i32_1 = arith.constant 0 : i32
    return %arg0, %c0_i32, %c0_i32_0 : i32, i32, i32
  }
}

</mosaic_0001>

<llo_original>
// kernel: tpu_custom_call.1
$region0: #{tpu_custom_call.1}
  #allocation0 [shape = 'u32[]', space=smem, size = 0x4, offset = 0x4, fixed_abs, tag = 'smem constant byte address 0x4 - core index']
  #allocation1 [shape = 'u32[144,128]{1,0:T(1,128)}', space=vmem, size = 0x12000, scoped, tag = 'internal scratch']
  #allocation2 [shape = 'f32[26,8]{1,0:T(8,128)}', space=vmem, size = 0x4000, scoped, tag = 'scratch operand']
  %s0 = inlined_call_operand.vmem [shape: f32[2,26,4], index: 0, kind: input, shape index: {}]
  %s1 = inlined_call_operand.vmem [shape: f32[3,4,8], index: 1, kind: input, shape index: {}]
  %s2 = inlined_call_operand.vmem [shape: f32[1,8], index: 2, kind: input, shape index: {}]
  %s3 = inlined_call_operand.vmem [shape: f32[1,8], index: 3, kind: input, shape index: {}]
  %s4 = inlined_call_operand.vmem [shape: f32[1,8], index: 4, kind: input, shape index: {}]
  %s5 = inlined_call_operand.vmem [shape: f32[3,8,8], index: 5, kind: input, shape index: {}]
  %s6 = inlined_call_operand.vmem [shape: f32[1,8], index: 6, kind: input, shape index: {}]
  %s7 = inlined_call_operand.vmem [shape: f32[4,8], index: 7, kind: input, shape index: {}]
  %s8 = inlined_call_operand.vmem [shape: f32[1,8], index: 8, kind: input, shape index: {}]
  %s9 = inlined_call_operand.hbm [shape: f32[2,8,8], index: 9, kind: output, shape index: {}]
  %s10 = sld [smem:[#allocation0]]
  $region69: #{tpu_custom_call.1} parent=0
    _
  %s12 = ssub.s32 1, %s10
  %s13 = scalar_select 0, %s12, %s10
  $region1: #{tpu_custom_call.1} parent=0
    #allocation3 [shape = 'u8[8192]{0}', space=vmem, size = 0x2000, scoped, tag = 'output window, operand 0']
    #allocation4 [shape = 's32[2]{0}', space=sflag, size = 0x8, scoped, tag = 'scoped memory for tpu_custom_call.1']
    %14 = vsyncpa [#allocation4], 0
    %s15 = scalar_lea.sflag [#allocation4], 1
    %16 = vsyncpa %s15, 0
    loop: start=0, step=1, limit=4
    $region2: #{tpu_custom_call.1} parent=1 // loop_pre_header
      _
    $region3: #{tpu_custom_call.1} parent=1 // loop_header
      %s18 = sphi 0, %s22
      %p19 = scmp.ge.s32.totalorder %s18, 4
      %s28 = sphi 0, %s30
      %s31 = sphi 0, %s28
      %s32 = sphi 0, %s31
      %s48 = sphi 0, %s32
      %s52 = sphi 0, %s52
      %s54 = sphi 0, %s52
      %s55 = sphi 0, %s54
      %s69 = sphi 0, %s55
      %s73 = sphi 0, %s73
      %s75 = sphi 0, %s73
      %s76 = sphi 0, %s75
      %s90 = sphi 0, %s76
      %s94 = sphi 0, %s94
      %s96 = sphi 0, %s94
      %s97 = sphi 0, %s96
      %s111 = sphi 0, %s97
      %s115 = sphi 0, %s115
      %s117 = sphi 0, %s115
      %s118 = sphi 0, %s117
      %s132 = sphi 0, %s118
      %s136 = sphi 0, %s136
      %s138 = sphi 0, %s136
      %s139 = sphi 0, %s138
      %s153 = sphi 0, %s139
      %s157 = sphi 0, %s157
      %s159 = sphi 0, %s157
      %s160 = sphi 0, %s159
      %s174 = sphi 0, %s160
      %s178 = sphi 0, %s178
      %s180 = sphi 0, %s178
      %s181 = sphi 0, %s180
      %s195 = sphi 0, %s181
      %s199 = sphi 0, %s199
      %s201 = sphi 0, %s199
      %s202 = sphi 0, %s201
      %s216 = sphi 0, %s202
      %s222 = sphi 0, %s224
      %s225 = sphi 0, %s222
      %s226 = sphi 0, %s225
      %s242 = sphi 0, %s226
    $region4: #{tpu_custom_call.1} parent=1 // loop_header_branch
      %21 = sbr.rel (%p19) target = $region8
    $region5: #{tpu_custom_call.1} parent=1 // loop_body
      %s23 = ssub.s32 %s18, 1
      %s24 = ssub.s32 %s18, 2
      %s25 = sadd.s32 %s18, 1
      %s26 = ssub.s32 %s18, %s25
      %p27 = scmp.eq.s32.totalorder %s26, 0
      %s29 = sadd.s32 %s28, 1
      %s30 = scalar_select %p27, %s28, %s29
      %p33 = pneg %p27
      %p34 = scmp.eq.s32.totalorder %s18, 1
      %p35 = por %p33, %p34
      %p36 = scmp.ne.s32.totalorder %s28, %s31
      %p37 = scmp.eq.s32.totalorder %s18, 0
      %p38 = por %p36, %p37
      %p39 = scmp.ne.s32.totalorder %s28, %s31
      %p40 = scmp.eq.s32.totalorder %s23, 1
      %p41 = por %p39, %p40
      %p42 = scmp.ne.s32.totalorder %s31, %s32
      %p43 = scmp.eq.s32.totalorder %s23, 0
      %p44 = por %p42, %p43
      %p45 = scmp.ne.s32.totalorder %s31, %s32
      %p46 = scmp.eq.s32.totalorder %s24, 1
      %p47 = por %p45, %p46
      %p49 = scmp.ne.s32.totalorder %s32, %s48
      %p50 = scmp.eq.s32.totalorder %s24, 0
      %p51 = por %p49, %p50
      %s53 = sadd.s32 %s52, 1
      %p56 = scmp.eq.s32.totalorder %s18, 1
      %p57 = scmp.ne.s32.totalorder %s52, %s54
      %p58 = scmp.eq.s32.totalorder %s18, 0
      %p59 = por %p57, %p58
      %p60 = scmp.ne.s32.totalorder %s52, %s54
      %p61 = scmp.eq.s32.totalorder %s23, 1
      %p62 = por %p60, %p61
      %p63 = scmp.ne.s32.totalorder %s54, %s55
      %p64 = scmp.eq.s32.totalorder %s23, 0
      %p65 = por %p63, %p64
      %p66 = scmp.ne.s32.totalorder %s54, %s55
      %p67 = scmp.eq.s32.totalorder %s24, 1
      %p68 = por %p66, %p67
      %p70 = scmp.ne.s32.totalorder %s55, %s69
      %p71 = scmp.eq.s32.totalorder %s24, 0
      %p72 = por %p70, %p71
      %s74 = sadd.s32 %s73, 1
      %p77 = scmp.eq.s32.totalorder %s18, 1
      %p78 = scmp.ne.s32.totalorder %s73, %s75
      %p79 = scmp.eq.s32.totalorder %s18, 0
      %p80 = por %p78, %p79
      %p81 = scmp.ne.s32.totalorder %s73, %s75
      %p82 = scmp.eq.s32.totalorder %s23, 1
      %p83 = por %p81, %p82
      %p84 = scmp.ne.s32.totalorder %s75, %s76
      %p85 = scmp.eq.s32.totalorder %s23, 0
      %p86 = por %p84, %p85
      %p87 = scmp.ne.s32.totalorder %s75, %s76
      %p88 = scmp.eq.s32.totalorder %s24, 1
      %p89 = por %p87, %p88
      %p91 = scmp.ne.s32.totalorder %s76, %s90
      %p92 = scmp.eq.s32.totalorder %s24, 0
      %p93 = por %p91, %p92
      %s95 = sadd.s32 %s94, 1
      %p98 = scmp.eq.s32.totalorder %s18, 1
      %p99 = scmp.ne.s32.totalorder %s94, %s96
      %p100 = scmp.eq.s32.totalorder %s18, 0
      %p101 = por %p99, %p100
      %p102 = scmp.ne.s32.totalorder %s94, %s96
      %p103 = scmp.eq.s32.totalorder %s23, 1
      %p104 = por %p102, %p103
      %p105 = scmp.ne.s32.totalorder %s96, %s97
      %p106 = scmp.eq.s32.totalorder %s23, 0
      %p107 = por %p105, %p106
      %p108 = scmp.ne.s32.totalorder %s96, %s97
      %p109 = scmp.eq.s32.totalorder %s24, 1
      %p110 = por %p108, %p109
      %p112 = scmp.ne.s32.totalorder %s97, %s111
      %p113 = scmp.eq.s32.totalorder %s24, 0
      %p114 = por %p112, %p113
      %s116 = sadd.s32 %s115, 1
      %p119 = scmp.eq.s32.totalorder %s18, 1
      %p120 = scmp.ne.s32.totalorder %s115, %s117
      %p121 = scmp.eq.s32.totalorder %s18, 0
      %p122 = por %p120, %p121
      %p123 = scmp.ne.s32.totalorder %s115, %s117
      %p124 = scmp.eq.s32.totalorder %s23, 1
      %p125 = por %p123, %p124
      %p126 = scmp.ne.s32.totalorder %s117, %s118
      %p127 = scmp.eq.s32.totalorder %s23, 0
      %p128 = por %p126, %p127
      %p129 = scmp.ne.s32.totalorder %s117, %s118
      %p130 = scmp.eq.s32.totalorder %s24, 1
      %p131 = por %p129, %p130
      %p133 = scmp.ne.s32.totalorder %s118, %s132
      %p134 = scmp.eq.s32.totalorder %s24, 0
      %p135 = por %p133, %p134
      %s137 = sadd.s32 %s136, 1
      %p140 = scmp.eq.s32.totalorder %s18, 1
      %p141 = scmp.ne.s32.totalorder %s136, %s138
      %p142 = scmp.eq.s32.totalorder %s18, 0
      %p143 = por %p141, %p142
      %p144 = scmp.ne.s32.totalorder %s136, %s138
      %p145 = scmp.eq.s32.totalorder %s23, 1
      %p146 = por %p144, %p145
      %p147 = scmp.ne.s32.totalorder %s138, %s139
      %p148 = scmp.eq.s32.totalorder %s23, 0
      %p149 = por %p147, %p148
      %p150 = scmp.ne.s32.totalorder %s138, %s139
      %p151 = scmp.eq.s32.totalorder %s24, 1
      %p152 = por %p150, %p151
      %p154 = scmp.ne.s32.totalorder %s139, %s153
      %p155 = scmp.eq.s32.totalorder %s24, 0
      %p156 = por %p154, %p155
      %s158 = sadd.s32 %s157, 1
      %p161 = scmp.eq.s32.totalorder %s18, 1
      %p162 = scmp.ne.s32.totalorder %s157, %s159
      %p163 = scmp.eq.s32.totalorder %s18, 0
      %p164 = por %p162, %p163
      %p165 = scmp.ne.s32.totalorder %s157, %s159
      %p166 = scmp.eq.s32.totalorder %s23, 1
      %p167 = por %p165, %p166
      %p168 = scmp.ne.s32.totalorder %s159, %s160
      %p169 = scmp.eq.s32.totalorder %s23, 0
      %p170 = por %p168, %p169
      %p171 = scmp.ne.s32.totalorder %s159, %s160
      %p172 = scmp.eq.s32.totalorder %s24, 1
      %p173 = por %p171, %p172
      %p175 = scmp.ne.s32.totalorder %s160, %s174
      %p176 = scmp.eq.s32.totalorder %s24, 0
      %p177 = por %p175, %p176
      %s179 = sadd.s32 %s178, 1
      %p182 = scmp.eq.s32.totalorder %s18, 1
      %p183 = scmp.ne.s32.totalorder %s178, %s180
      %p184 = scmp.eq.s32.totalorder %s18, 0
      %p185 = por %p183, %p184
      %p186 = scmp.ne.s32.totalorder %s178, %s180
      %p187 = scmp.eq.s32.totalorder %s23, 1
      %p188 = por %p186, %p187
      %p189 = scmp.ne.s32.totalorder %s180, %s181
      %p190 = scmp.eq.s32.totalorder %s23, 0
      %p191 = por %p189, %p190
      %p192 = scmp.ne.s32.totalorder %s180, %s181
      %p193 = scmp.eq.s32.totalorder %s24, 1
      %p194 = por %p192, %p193
      %p196 = scmp.ne.s32.totalorder %s181, %s195
      %p197 = scmp.eq.s32.totalorder %s24, 0
      %p198 = por %p196, %p197
      %s200 = sadd.s32 %s199, 1
      %p203 = scmp.eq.s32.totalorder %s18, 1
      %p204 = scmp.ne.s32.totalorder %s199, %s201
      %p205 = scmp.eq.s32.totalorder %s18, 0
      %p206 = por %p204, %p205
      %p207 = scmp.ne.s32.totalorder %s199, %s201
      %p208 = scmp.eq.s32.totalorder %s23, 1
      %p209 = por %p207, %p208
      %p210 = scmp.ne.s32.totalorder %s201, %s202
      %p211 = scmp.eq.s32.totalorder %s23, 0
      %p212 = por %p210, %p211
      %p213 = scmp.ne.s32.totalorder %s201, %s202
      %p214 = scmp.eq.s32.totalorder %s24, 1
      %p215 = por %p213, %p214
      %p217 = scmp.ne.s32.totalorder %s202, %s216
      %p218 = scmp.eq.s32.totalorder %s24, 0
      %p219 = por %p217, %p218
      %s220 = ssub.s32 %s18, %s25
      %p221 = scmp.eq.s32.totalorder %s220, 0
      %s223 = sadd.s32 %s222, 1
      %s224 = scalar_select %p221, %s222, %s223
      %p227 = pneg %p221
      %p228 = scmp.eq.s32.totalorder %s18, 1
      %p229 = por %p227, %p228
      %p230 = scmp.ne.s32.totalorder %s222, %s225
      %p231 = scmp.eq.s32.totalorder %s18, 0
      %p232 = por %p230, %p231
      %p233 = scmp.ne.s32.totalorder %s222, %s225
      %p234 = scmp.eq.s32.totalorder %s23, 1
      %p235 = por %p233, %p234
      %p236 = scmp.ne.s32.totalorder %s225, %s226
      %p237 = scmp.eq.s32.totalorder %s23, 0
      %p238 = por %p236, %p237
      %p239 = scmp.ne.s32.totalorder %s225, %s226
      %p240 = scmp.eq.s32.totalorder %s24, 1
      %p241 = por %p239, %p240
      %p243 = scmp.ne.s32.totalorder %s226, %s242
      %p244 = scmp.eq.s32.totalorder %s24, 0
      %p245 = por %p243, %p244
      %p246 = scmp.le.s32.totalorder 1, %s18
      %p247 = scmp.lt.s32.totalorder %s18, 3
      %p248 = pnand %p246, %p247
      %p249 = pneg %p248
      // Predicated region
      $region9: #{tpu_custom_call.1} parent=5 // pred_check
        _
      $region10: #{tpu_custom_call.1} parent=5 // pred_check_branch
        %251 = sbr.rel (%p248) target = $region12
      $region11: #{tpu_custom_call.1} parent=5 // pred_region
        %s252 = ssub.s32 %s18, 1
        // Predicated region
        $region13: #{tpu_custom_call.1} parent=11 // pred_check
          %p253 = pneg %p65
        $region14: #{tpu_custom_call.1} parent=11 // pred_check_branch
          %255 = sbr.rel (%p253) target = $region16
        $region15: #{tpu_custom_call.1} parent=11 // pred_region
          _
        $region16: #{tpu_custom_call.1} parent=11 // pred_fallthru
          _
        // Predicated region
        $region17: #{tpu_custom_call.1} parent=11 // pred_check
          %p256 = pneg %p86
        $region18: #{tpu_custom_call.1} parent=11 // pred_check_branch
          %258 = sbr.rel (%p256) target = $region20
        $region19: #{tpu_custom_call.1} parent=11 // pred_region
          _
        $region20: #{tpu_custom_call.1} parent=11 // pred_fallthru
          _
        // Predicated region
        $region21: #{tpu_custom_call.1} parent=11 // pred_check
          %p259 = pneg %p107
        $region22: #{tpu_custom_call.1} parent=11 // pred_check_branch
          %261 = sbr.rel (%p259) target = $region24
        $region23: #{tpu_custom_call.1} parent=11 // pred_region
          _
        $region24: #{tpu_custom_call.1} parent=11 // pred_fallthru
          _
        // Predicated region
        $region25: #{tpu_custom_call.1} parent=11 // pred_check
          %p262 = pneg %p128
        $region26: #{tpu_custom_call.1} parent=11 // pred_check_branch
          %264 = sbr.rel (%p262) target = $region28
        $region27: #{tpu_custom_call.1} parent=11 // pred_region
          _
        $region28: #{tpu_custom_call.1} parent=11 // pred_fallthru
          _
        // Predicated region
        $region29: #{tpu_custom_call.1} parent=11 // pred_check
          %p265 = pneg %p149
        $region30: #{tpu_custom_call.1} parent=11 // pred_check_branch
          %267 = sbr.rel (%p265) target = $region32
        $region31: #{tpu_custom_call.1} parent=11 // pred_region
          _
        $region32: #{tpu_custom_call.1} parent=11 // pred_fallthru
          _
        // Predicated region
        $region33: #{tpu_custom_call.1} parent=11 // pred_check
          %p268 = pneg %p170
        $region34: #{tpu_custom_call.1} parent=11 // pred_check_branch
          %270 = sbr.rel (%p268) target = $region36
        $region35: #{tpu_custom_call.1} parent=11 // pred_region
          _
        $region36: #{tpu_custom_call.1} parent=11 // pred_fallthru
          _
        // Predicated region
        $region37: #{tpu_custom_call.1} parent=11 // pred_check
          %p271 = pneg %p191
        $region38: #{tpu_custom_call.1} parent=11 // pred_check_branch
          %273 = sbr.rel (%p271) target = $region40
        $region39: #{tpu_custom_call.1} parent=11 // pred_region
          _
        $region40: #{tpu_custom_call.1} parent=11 // pred_fallthru
          _
        // Predicated region
        $region41: #{tpu_custom_call.1} parent=11 // pred_check
          %p274 = pneg %p212
        $region42: #{tpu_custom_call.1} parent=11 // pred_check_branch
          %276 = sbr.rel (%p274) target = $region44
        $region43: #{tpu_custom_call.1} parent=11 // pred_region
          _
        $region44: #{tpu_custom_call.1} parent=11 // pred_fallthru
          _
      $region12: #{tpu_custom_call.1} parent=5 // pred_fallthru
        _
      %p277 = scmp.lt.s32.totalorder %s18, 2
      // Predicated region
      $region45: #{tpu_custom_call.1} parent=5 // pred_check
        %p278 = pneg %p277
      $region46: #{tpu_custom_call.1} parent=5 // pred_check_branch
        %280 = sbr.rel (%p278) target = $region48
      $region47: #{tpu_custom_call.1} parent=5 // pred_region
        // Predicated region
        $region49: #{tpu_custom_call.1} parent=47 // pred_check
          %p281 = pneg %p38
        $region50: #{tpu_custom_call.1} parent=47 // pred_check_branch
          %283 = sbr.rel (%p281) target = $region52
        $region51: #{tpu_custom_call.1} parent=47 // pred_region
          %p284 = scmp.lt.s32.totalorder %s18, 1
          %s285 = scalar_select %p284, %s18, 1
          %s286 = smul.addr %s285, 4
          %s287 = smul.addr %s286, 8
          %s288 = scalar_lea.vmem %s0, %s287
        $region52: #{tpu_custom_call.1} parent=47 // pred_fallthru
          _
      $region48: #{tpu_custom_call.1} parent=5 // pred_fallthru
        _
      %p289 = scmp.le.s32.totalorder 1, %s18
      %p290 = scmp.lt.s32.totalorder %s18, 3
      %p291 = pnand %p289, %p290
      %p292 = pneg %p291
      // Predicated region
      $region53: #{tpu_custom_call.1} parent=5 // pred_check
        _
      $region54: #{tpu_custom_call.1} parent=5 // pred_check_branch
        %294 = sbr.rel (%p291) target = $region56
      $region55: #{tpu_custom_call.1} parent=5 // pred_region
        %s295 = ssub.s32 %s18, 1
        %p296 = scmp.lt.s32.totalorder %s23, 1
        %s297 = scalar_select %p296, %s23, 1
        %s298 = smul.addr %s297, 4
        %s299 = smul.addr %s298, 8
        %s300 = scalar_lea.vmem %s0, %s299
        %p301 = pneg %p44
        %p302 = pneg %p41
        %p303 = pneg %p65
        %p304 = pneg %p62
        %p305 = pneg %p86
        %p306 = pneg %p83
        %p307 = pneg %p107
        %p308 = pneg %p104
        %p309 = pneg %p128
        %p310 = pneg %p125
        %p311 = pneg %p149
        %p312 = pneg %p146
        %p313 = pneg %p170
        %p314 = pneg %p167
        %p315 = pneg %p191
        %p316 = pneg %p188
        %p317 = pneg %p212
        %p318 = pneg %p209
        %p319 = pneg %p238
        %p320 = pneg %p235
        %s321 = sand.u32 %s225, 1
        %s322 = scalar_lea.sflag [#allocation4], %s321
        %s323 = sand.u32 %s225, 1
        %s324 = smul.addr %s323, 8
        %s325 = scalar_lea.vmem [#allocation3], %s324
        %p326 = scmp.lt.s32.totalorder %s23, 1
        %s327 = scalar_select %p326, %s23, 1
        %s328 = smul.addr %s327, 4
        %s329 = smul.addr %s328, 8
        %s330 = scalar_lea.vmem %s0, %s329
        %v331 = vld [vmem:[%s330] sm:$0xff]
        %v332 = vld [vmem:[%s330 + $0x8] sm:$0xff]
        %v333 = vld [vmem:[%s330 + $0x10] sm:$0xff]
        %v334 = vld [vmem:[%s330 + $0x1] sm:$0xff]
        %v335 = vld [vmem:[%s330 + $0x9] sm:$0xff]
        %v336 = vld [vmem:[%s330 + $0x11] sm:$0xff]
        %v337 = vld [vmem:[%s330 + $0x2] sm:$0xff]
        %v338 = vld [vmem:[%s330 + $0xa] sm:$0xff]
        %v339 = vld [vmem:[%s330 + $0x12] sm:$0xff]
        %v340 = vld [vmem:[%s1] sm:$0xf]
        %s341 = scalar_lea.vmem %s1, 4
        %v342 = vld [vmem:[%s341] sm:$0xf]
        %vm343 = vcmask 31744
        %v345 = vsel %vm343, %v334, 0
        %v348 = vsel %vm343, %v335, 0
        %v351 = vsel %vm343, %v336, 0
        %vm353 = vcmask 1043456
        %v355 = vsel %vm353, %v342, 0
        %357 = vmatprep.subr.mxu0 0.0
        %358 = vmatpush1.msra.mxu0 0.0
        %359 = vmatprep.subr.mxu0 0.0
        %360 = vmatpush1.msra.mxu0 0.0
        %361 = vmatprep.subr.mxu0 0.0
        %362 = vmatpush1.msra.mxu0 0.0
        %363 = vmatprep.subr.mxu0 0.0
        %364 = vmatpush1.msra.mxu0 0.0
        %365 = vmatprep.subr.mxu0 0.0
        %366 = vmatpush1.msra.mxu0 0.0
        %367 = vmatprep.subr.mxu0 0.0
        %368 = vmatpush1.msra.mxu0 0.0
        %369 = vmatprep.subr.mxu0 0.0
        %370 = vmatpush1.msra.mxu0 0.0
        %371 = vmatprep.subr.mxu0 0.0
        %372 = vmatpush1.msra.mxu0 0.0
        %373 = vmatprep.subr.mxu0 0.0
        %374 = vmatpush1.msra.mxu0 0.0
        %375 = vmatprep.subr.mxu0 0.0
        %376 = vmatpush1.msra.mxu0 0.0
        %377 = vmatprep.subr.mxu0 0.0
        %378 = vmatpush1.msra.mxu0 0.0
        %379 = vmatprep.subr.mxu0 0.0
        %380 = vmatpush1.msra.mxu0 0.0
        %381 = vmatprep.subr.mxu0 0.0
        %382 = vmatpush1.msra.mxu0 0.0
        %383 = vmatprep.subr.mxu0 0.0
        %384 = vmatpush1.msra.mxu0 0.0
        %385 = vmatprep.subr.mxu0 0.0
        %386 = vmatpush1.msra.mxu0 0.0
        %387 = vmatprep.subr.mxu0 0.0
        %388 = vmatpush1.msra.mxu0 %v355
        %389 = vmatprep.subr.mxu0 0.0
        %390 = vmatpush2.msra.mxu0 0.0
        %391 = vmatprep.subr.mxu0 0.0
        %392 = vmatpush2.msra.mxu0 0.0
        %393 = vmatprep.subr.mxu0 0.0
        %394 = vmatpush2.msra.mxu0 0.0
        %395 = vmatprep.subr.mxu0 0.0
        %396 = vmatpush2.msra.mxu0 0.0
        %397 = vmatprep.subr.mxu0 0.0
        %398 = vmatpush2.msra.mxu0 0.0
        %399 = vmatprep.subr.mxu0 0.0
        %400 = vmatpush2.msra.mxu0 0.0
        %401 = vmatprep.subr.mxu0 0.0
        %402 = vmatpush2.msra.mxu0 0.0
        %403 = vmatprep.subr.mxu0 0.0
        %404 = vmatpush2.msra.mxu0 0.0
        %405 = vmatprep.subr.mxu0 0.0
        %406 = vmatpush2.msra.mxu0 0.0
        %407 = vmatprep.subr.mxu0 0.0
        %408 = vmatpush2.msra.mxu0 0.0
        %409 = vmatprep.subr.mxu0 0.0
        %410 = vmatpush2.msra.mxu0 0.0
        %411 = vmatprep.subr.mxu0 0.0
        %412 = vmatpush2.msra.mxu0 0.0
        %413 = vmatprep.subr.mxu0 0.0
        %414 = vmatpush2.msra.mxu0 0.0
        %415 = vmatprep.subr.mxu0 0.0
        %416 = vmatpush2.msra.mxu0 0.0
        %417 = vmatprep.subr.mxu0 0.0
        %418 = vmatpush2.msra.mxu0 0.0
        %419 = vmatprep.subr.mxu0 0.0
        %420 = vmatpush2.msra.mxu0 0.0
        %421 = vmatprep.mubr.f32.mxu0 0.0
        %422 = vmatmul.mubr.f32.gmra.mxu0 %v345
        %v423 = vpop.f32.mrf.mxu0
        %v424 = vadd.f32 0.0, %v423
        %v425 = vpop.f32.mrf.mxu0
        %426 = vmatprep.mubr.f32.mxu0 0.0
        %427 = vmatmul.mubr.f32.gmra.mxu0 %v348
        %v428 = vpop.f32.mrf.mxu0
        %v429 = vadd.f32 0.0, %v428
        %v430 = vpop.f32.mrf.mxu0
        %431 = vmatprep.mubr.f32.mxu0 0.0
        %432 = vmatmul.mubr.f32.gmra.mxu0 %v351
        %v433 = vpop.f32.mrf.mxu0
        %v434 = vadd.f32 0.0, %v433
        %v435 = vpop.f32.mrf.mxu0
        %436 = vdwg.mxu0
        %v438 = vsel %vm343, %v331, 0
        %v441 = vsel %vm343, %v332, 0
        %v444 = vsel %vm343, %v333, 0
        %v447 = vsel %vm353, %v340, 0
        %449 = vmatprep.subr.mxu0 0.0
        %450 = vmatpush1.msra.mxu0 0.0
        %451 = vmatprep.subr.mxu0 0.0
        %452 = vmatpush1.msra.mxu0 0.0
        %453 = vmatprep.subr.mxu0 0.0
        %454 = vmatpush1.msra.mxu0 0.0
        %455 = vmatprep.subr.mxu0 0.0
        %456 = vmatpush1.msra.mxu0 0.0
        %457 = vmatprep.subr.mxu0 0.0
        %458 = vmatpush1.msra.mxu0 0.0
        %459 = vmatprep.subr.mxu0 0.0
        %460 = vmatpush1.msra.mxu0 0.0
        %461 = vmatprep.subr.mxu0 0.0
        %462 = vmatpush1.msra.mxu0 0.0
        %463 = vmatprep.subr.mxu0 0.0
        %464 = vmatpush1.msra.mxu0 0.0
        %465 = vmatprep.subr.mxu0 0.0
        %466 = vmatpush1.msra.mxu0 0.0
        %467 = vmatprep.subr.mxu0 0.0
        %468 = vmatpush1.msra.mxu0 0.0
        %469 = vmatprep.subr.mxu0 0.0
        %470 = vmatpush1.msra.mxu0 0.0
        %471 = vmatprep.subr.mxu0 0.0
        %472 = vmatpush1.msra.mxu0 0.0
        %473 = vmatprep.subr.mxu0 0.0
        %474 = vmatpush1.msra.mxu0 0.0
        %475 = vmatprep.subr.mxu0 0.0
        %476 = vmatpush1.msra.mxu0 0.0
        %477 = vmatprep.subr.mxu0 0.0
        %478 = vmatpush1.msra.mxu0 0.0
        %479 = vmatprep.subr.mxu0 0.0
        %480 = vmatpush1.msra.mxu0 %v447
        %481 = vmatprep.subr.mxu0 0.0
        %482 = vmatpush2.msra.mxu0 0.0
        %483 = vmatprep.subr.mxu0 0.0
        %484 = vmatpush2.msra.mxu0 0.0
        %485 = vmatprep.subr.mxu0 0.0
        %486 = vmatpush2.msra.mxu0 0.0
        %487 = vmatprep.subr.mxu0 0.0
        %488 = vmatpush2.msra.mxu0 0.0
        %489 = vmatprep.subr.mxu0 0.0
        %490 = vmatpush2.msra.mxu0 0.0
        %491 = vmatprep.subr.mxu0 0.0
        %492 = vmatpush2.msra.mxu0 0.0
        %493 = vmatprep.subr.mxu0 0.0
        %494 = vmatpush2.msra.mxu0 0.0
        %495 = vmatprep.subr.mxu0 0.0
        %496 = vmatpush2.msra.mxu0 0.0
        %497 = vmatprep.subr.mxu0 0.0
        %498 = vmatpush2.msra.mxu0 0.0
        %499 = vmatprep.subr.mxu0 0.0
        %500 = vmatpush2.msra.mxu0 0.0
        %501 = vmatprep.subr.mxu0 0.0
        %502 = vmatpush2.msra.mxu0 0.0
        %503 = vmatprep.subr.mxu0 0.0
        %504 = vmatpush2.msra.mxu0 0.0
        %505 = vmatprep.subr.mxu0 0.0
        %506 = vmatpush2.msra.mxu0 0.0
        %507 = vmatprep.subr.mxu0 0.0
        %508 = vmatpush2.msra.mxu0 0.0
        %509 = vmatprep.subr.mxu0 0.0
        %510 = vmatpush2.msra.mxu0 0.0
        %511 = vmatprep.subr.mxu0 0.0
        %512 = vmatpush2.msra.mxu0 0.0
        %513 = vmatprep.mubr.f32.mxu0 0.0
        %514 = vmatmul.mubr.f32.gmra.mxu0 %v438
        %v515 = vpop.f32.mrf.mxu0
        %v516 = vadd.f32 %v424, %v515
        %v517 = vpop.f32.mrf.mxu0
        %518 = vmatprep.mubr.f32.mxu0 0.0
        %519 = vmatmul.mubr.f32.gmra.mxu0 %v441
        %v520 = vpop.f32.mrf.mxu0
        %v521 = vadd.f32 %v429, %v520
        %v522 = vpop.f32.mrf.mxu0
        %523 = vmatprep.mubr.f32.mxu0 0.0
        %524 = vmatmul.mubr.f32.gmra.mxu0 %v444
        %v525 = vpop.f32.mrf.mxu0
        %v526 = vadd.f32 %v434, %v525
        %v527 = vpop.f32.mrf.mxu0
        %528 = vdwg.mxu0
        %s529 = scalar_lea.vmem %s1, 8
        %v530 = vld [vmem:[%s529] sm:$0xf]
        %v532 = vsel %vm343, %v337, 0
        %v535 = vsel %vm343, %v338, 0
        %v538 = vsel %vm343, %v339, 0
        %v541 = vsel %vm353, %v530, 0
        %543 = vmatprep.subr.mxu0 0.0
        %544 = vmatpush1.msra.mxu0 0.0
        %545 = vmatprep.subr.mxu0 0.0
        %546 = vmatpush1.msra.mxu0 0.0
        %547 = vmatprep.subr.mxu0 0.0
        %548 = vmatpush1.msra.mxu0 0.0
        %549 = vmatprep.subr.mxu0 0.0
        %550 = vmatpush1.msra.mxu0 0.0
        %551 = vmatprep.subr.mxu0 0.0
        %552 = vmatpush1.msra.mxu0 0.0
        %553 = vmatprep.subr.mxu0 0.0
        %554 = vmatpush1.msra.mxu0 0.0
        %555 = vmatprep.subr.mxu0 0.0
        %556 = vmatpush1.msra.mxu0 0.0
        %557 = vmatprep.subr.mxu0 0.0
        %558 = vmatpush1.msra.mxu0 0.0
        %559 = vmatprep.subr.mxu0 0.0
        %560 = vmatpush1.msra.mxu0 0.0
        %561 = vmatprep.subr.mxu0 0.0
        %562 = vmatpush1.msra.mxu0 0.0
        %563 = vmatprep.subr.mxu0 0.0
        %564 = vmatpush1.msra.mxu0 0.0
        %565 = vmatprep.subr.mxu0 0.0
        %566 = vmatpush1.msra.mxu0 0.0
        %567 = vmatprep.subr.mxu0 0.0
        %568 = vmatpush1.msra.mxu0 0.0
        %569 = vmatprep.subr.mxu0 0.0
        %570 = vmatpush1.msra.mxu0 0.0
        %571 = vmatprep.subr.mxu0 0.0
        %572 = vmatpush1.msra.mxu0 0.0
        %573 = vmatprep.subr.mxu0 0.0
        %574 = vmatpush1.msra.mxu0 %v541
        %575 = vmatprep.subr.mxu0 0.0
        %576 = vmatpush2.msra.mxu0 0.0
        %577 = vmatprep.subr.mxu0 0.0
        %578 = vmatpush2.msra.mxu0 0.0
        %579 = vmatprep.subr.mxu0 0.0
        %580 = vmatpush2.msra.mxu0 0.0
        %581 = vmatprep.subr.mxu0 0.0
        %582 = vmatpush2.msra.mxu0 0.0
        %583 = vmatprep.subr.mxu0 0.0
        %584 = vmatpush2.msra.mxu0 0.0
        %585 = vmatprep.subr.mxu0 0.0
        %586 = vmatpush2.msra.mxu0 0.0
        %587 = vmatprep.subr.mxu0 0.0
        %588 = vmatpush2.msra.mxu0 0.0
        %589 = vmatprep.subr.mxu0 0.0
        %590 = vmatpush2.msra.mxu0 0.0
        %591 = vmatprep.subr.mxu0 0.0
        %592 = vmatpush2.msra.mxu0 0.0
        %593 = vmatprep.subr.mxu0 0.0
        %594 = vmatpush2.msra.mxu0 0.0
        %595 = vmatprep.subr.mxu0 0.0
        %596 = vmatpush2.msra.mxu0 0.0
        %597 = vmatprep.subr.mxu0 0.0
        %598 = vmatpush2.msra.mxu0 0.0
        %599 = vmatprep.subr.mxu0 0.0
        %600 = vmatpush2.msra.mxu0 0.0
        %601 = vmatprep.subr.mxu0 0.0
        %602 = vmatpush2.msra.mxu0 0.0
        %603 = vmatprep.subr.mxu0 0.0
        %604 = vmatpush2.msra.mxu0 0.0
        %605 = vmatprep.subr.mxu0 0.0
        %606 = vmatpush2.msra.mxu0 0.0
        %607 = vmatprep.mubr.f32.mxu0 0.0
        %608 = vmatmul.mubr.f32.gmra.mxu0 %v532
        %v609 = vpop.f32.mrf.mxu0
        %v610 = vadd.f32 0.0, %v609
        %v611 = vpop.f32.mrf.mxu0
        %612 = vmatprep.mubr.f32.mxu0 0.0
        %613 = vmatmul.mubr.f32.gmra.mxu0 %v535
        %v614 = vpop.f32.mrf.mxu0
        %v615 = vadd.f32 0.0, %v614
        %v616 = vpop.f32.mrf.mxu0
        %617 = vmatprep.mubr.f32.mxu0 0.0
        %618 = vmatmul.mubr.f32.gmra.mxu0 %v538
        %v619 = vpop.f32.mrf.mxu0
        %v620 = vadd.f32 0.0, %v619
        %v621 = vpop.f32.mrf.mxu0
        %622 = vdwg.mxu0
        %v623 = vadd.f32 %v516, %v610
        %v624 = vadd.f32 %v521, %v615
        %v625 = vadd.f32 %v526, %v620
        %v626 = vld [vmem:[%s2] sm:$0x1]
        %v628 = vlaneseq
        %v629 = vshrl.u32 %v628, 7
        %v630 = vsub.s32 0, %v629
        %v631 = vrot.slane %v626, %v630
        %v633 = vadd.f32 %v623, %v631
        %v634 = vadd.f32 %v624, %v631
        %v635 = vadd.f32 %v625, %v631
        %v636 = vld [vmem:[%s3] sm:$0x1]
        %v638 = vlaneseq
        %v639 = vshrl.u32 %v638, 7
        %v640 = vsub.s32 0, %v639
        %v641 = vrot.slane %v636, %v640
        %v643 = vmul.f32 %v633, %v641
        %v644 = vmul.f32 %v634, %v641
        %v645 = vmul.f32 %v635, %v641
        %v646 = vld [vmem:[%s4] sm:$0x1]
        %v648 = vlaneseq
        %v649 = vshrl.u32 %v648, 7
        %v650 = vsub.s32 0, %v649
        %v651 = vrot.slane %v646, %v650
        %v653 = vadd.f32 %v643, %v651
        %v654 = vadd.f32 %v644, %v651
        %v655 = vadd.f32 %v645, %v651
        %vm656 = vcmp.ge.f32.partialorder %v653, 0.0
        %vm657 = vcmp.ge.f32.partialorder %v654, 0.0
        %vm658 = vcmp.ge.f32.partialorder %v655, 0.0
        %v659 = vmul.f32 %v653, 0.3
        %v660 = vmul.f32 %v654, 0.3
        %v661 = vmul.f32 %v655, 0.3
        %v662 = vsel %vm656, %v653, %v659
        %v663 = vsel %vm657, %v654, %v660
        %v664 = vsel %vm658, %v655, %v661
        %vm665 = vcmask 57344
        %666 = vst.msk [vmem:[#allocation2] sm:$0x1] %vm665, 0.0
        %667 = vst.msk [vmem:[#allocation2 + $0x19] sm:$0x1] %vm665, 0.0
        %vm668 = vcmask 64512
        %669 = vst.msk [vmem:[#allocation2 + $0x1] sm:$0xff] %vm668, %v662
        %670 = vst.msk [vmem:[#allocation2 + $0x9] sm:$0xff] %vm668, %v663
        %671 = vst.msk [vmem:[#allocation2 + $0x11] sm:$0xff] %vm668, %v664
        %v672 = vld [vmem:[#allocation2] sm:$0xff]
        %v673 = vld [vmem:[#allocation2 + $0x8] sm:$0xff]
        %v674 = vld [vmem:[#allocation2 + $0x10] sm:$0xff]
        %v675 = vld [vmem:[%s5] sm:$0xff]
        %v676 = vld [vmem:[#allocation2 + $0x1] sm:$0xff]
        %v677 = vld [vmem:[#allocation2 + $0x9] sm:$0xff]
        %v678 = vld [vmem:[#allocation2 + $0x11] sm:$0xff]
        %s679 = scalar_lea.vmem %s5, 8
        %v680 = vld [vmem:[%s679] sm:$0xff]
        %v682 = vsel %vm668, %v676, 0
        %v685 = vsel %vm668, %v677, 0
        %v688 = vsel %vm668, %v678, 0
        %690 = vmatprep.subr.mxu0 0.0
        %691 = vmatpush1.msra.mxu0 0.0
        %692 = vmatprep.subr.mxu0 0.0
        %693 = vmatpush1.msra.mxu0 0.0
        %694 = vmatprep.subr.mxu0 0.0
        %695 = vmatpush1.msra.mxu0 0.0
        %696 = vmatprep.subr.mxu0 0.0
        %697 = vmatpush1.msra.mxu0 0.0
        %698 = vmatprep.subr.mxu0 0.0
        %699 = vmatpush1.msra.mxu0 0.0
        %700 = vmatprep.subr.mxu0 0.0
        %701 = vmatpush1.msra.mxu0 0.0
        %702 = vmatprep.subr.mxu0 0.0
        %703 = vmatpush1.msra.mxu0 0.0
        %704 = vmatprep.subr.mxu0 0.0
        %705 = vmatpush1.msra.mxu0 0.0
        %706 = vmatprep.subr.mxu0 0.0
        %707 = vmatpush1.msra.mxu0 0.0
        %708 = vmatprep.subr.mxu0 0.0
        %709 = vmatpush1.msra.mxu0 0.0
        %710 = vmatprep.subr.mxu0 0.0
        %711 = vmatpush1.msra.mxu0 0.0
        %712 = vmatprep.subr.mxu0 0.0
        %713 = vmatpush1.msra.mxu0 0.0
        %714 = vmatprep.subr.mxu0 0.0
        %715 = vmatpush1.msra.mxu0 0.0
        %716 = vmatprep.subr.mxu0 0.0
        %717 = vmatpush1.msra.mxu0 0.0
        %718 = vmatprep.subr.mxu0 0.0
        %719 = vmatpush1.msra.mxu0 0.0
        %720 = vmatprep.subr.mxu0 0.0
        %721 = vmatpush1.msra.mxu0 %v680
        %722 = vmatprep.subr.mxu0 0.0
        %723 = vmatpush2.msra.mxu0 0.0
        %724 = vmatprep.subr.mxu0 0.0
        %725 = vmatpush2.msra.mxu0 0.0
        %726 = vmatprep.subr.mxu0 0.0
        %727 = vmatpush2.msra.mxu0 0.0
        %728 = vmatprep.subr.mxu0 0.0
        %729 = vmatpush2.msra.mxu0 0.0
        %730 = vmatprep.subr.mxu0 0.0
        %731 = vmatpush2.msra.mxu0 0.0
        %732 = vmatprep.subr.mxu0 0.0
        %733 = vmatpush2.msra.mxu0 0.0
        %734 = vmatprep.subr.mxu0 0.0
        %735 = vmatpush2.msra.mxu0 0.0
        %736 = vmatprep.subr.mxu0 0.0
        %737 = vmatpush2.msra.mxu0 0.0
        %738 = vmatprep.subr.mxu0 0.0
        %739 = vmatpush2.msra.mxu0 0.0
        %740 = vmatprep.subr.mxu0 0.0
        %741 = vmatpush2.msra.mxu0 0.0
        %742 = vmatprep.subr.mxu0 0.0
        %743 = vmatpush2.msra.mxu0 0.0
        %744 = vmatprep.subr.mxu0 0.0
        %745 = vmatpush2.msra.mxu0 0.0
        %746 = vmatprep.subr.mxu0 0.0
        %747 = vmatpush2.msra.mxu0 0.0
        %748 = vmatprep.subr.mxu0 0.0
        %749 = vmatpush2.msra.mxu0 0.0
        %750 = vmatprep.subr.mxu0 0.0
        %751 = vmatpush2.msra.mxu0 0.0
        %752 = vmatprep.subr.mxu0 0.0
        %753 = vmatpush2.msra.mxu0 0.0
        %754 = vmatprep.mubr.f32.mxu0 0.0
        %755 = vmatmul.mubr.f32.gmra.mxu0 %v682
        %v756 = vpop.f32.mrf.mxu0
        %v757 = vadd.f32 0.0, %v756
        %v758 = vpop.f32.mrf.mxu0
        %759 = vmatprep.mubr.f32.mxu0 0.0
        %760 = vmatmul.mubr.f32.gmra.mxu0 %v685
        %v761 = vpop.f32.mrf.mxu0
        %v762 = vadd.f32 0.0, %v761
        %v763 = vpop.f32.mrf.mxu0
        %764 = vmatprep.mubr.f32.mxu0 0.0
        %765 = vmatmul.mubr.f32.gmra.mxu0 %v688
        %v766 = vpop.f32.mrf.mxu0
        %v767 = vadd.f32 0.0, %v766
        %v768 = vpop.f32.mrf.mxu0
        %769 = vdwg.mxu0
        %v771 = vsel %vm668, %v672, 0
        %v774 = vsel %vm668, %v673, 0
        %v777 = vsel %vm668, %v674, 0
        %779 = vmatprep.subr.mxu0 0.0
        %780 = vmatpush1.msra.mxu0 0.0
        %781 = vmatprep.subr.mxu0 0.0
        %782 = vmatpush1.msra.mxu0 0.0
        %783 = vmatprep.subr.mxu0 0.0
        %784 = vmatpush1.msra.mxu0 0.0
        %785 = vmatprep.subr.mxu0 0.0
        %786 = vmatpush1.msra.mxu0 0.0
        %787 = vmatprep.subr.mxu0 0.0
        %788 = vmatpush1.msra.mxu0 0.0
        %789 = vmatprep.subr.mxu0 0.0
        %790 = vmatpush1.msra.mxu0 0.0
        %791 = vmatprep.subr.mxu0 0.0
        %792 = vmatpush1.msra.mxu0 0.0
        %793 = vmatprep.subr.mxu0 0.0
        %794 = vmatpush1.msra.mxu0 0.0
        %795 = vmatprep.subr.mxu0 0.0
        %796 = vmatpush1.msra.mxu0 0.0
        %797 = vmatprep.subr.mxu0 0.0
        %798 = vmatpush1.msra.mxu0 0.0
        %799 = vmatprep.subr.mxu0 0.0
        %800 = vmatpush1.msra.mxu0 0.0
        %801 = vmatprep.subr.mxu0 0.0
        %802 = vmatpush1.msra.mxu0 0.0
        %803 = vmatprep.subr.mxu0 0.0
        %804 = vmatpush1.msra.mxu0 0.0
        %805 = vmatprep.subr.mxu0 0.0
        %806 = vmatpush1.msra.mxu0 0.0
        %807 = vmatprep.subr.mxu0 0.0
        %808 = vmatpush1.msra.mxu0 0.0
        %809 = vmatprep.subr.mxu0 0.0
        %810 = vmatpush1.msra.mxu0 %v675
        %811 = vmatprep.subr.mxu0 0.0
        %812 = vmatpush2.msra.mxu0 0.0
        %813 = vmatprep.subr.mxu0 0.0
        %814 = vmatpush2.msra.mxu0 0.0
        %815 = vmatprep.subr.mxu0 0.0
        %816 = vmatpush2.msra.mxu0 0.0
        %817 = vmatprep.subr.mxu0 0.0
        %818 = vmatpush2.msra.mxu0 0.0
        %819 = vmatprep.subr.mxu0 0.0
        %820 = vmatpush2.msra.mxu0 0.0
        %821 = vmatprep.subr.mxu0 0.0
        %822 = vmatpush2.msra.mxu0 0.0
        %823 = vmatprep.subr.mxu0 0.0
        %824 = vmatpush2.msra.mxu0 0.0
        %825 = vmatprep.subr.mxu0 0.0
        %826 = vmatpush2.msra.mxu0 0.0
        %827 = vmatprep.subr.mxu0 0.0
        %828 = vmatpush2.msra.mxu0 0.0
        %829 = vmatprep.subr.mxu0 0.0
        %830 = vmatpush2.msra.mxu0 0.0
        %831 = vmatprep.subr.mxu0 0.0
        %832 = vmatpush2.msra.mxu0 0.0
        %833 = vmatprep.subr.mxu0 0.0
        %834 = vmatpush2.msra.mxu0 0.0
        %835 = vmatprep.subr.mxu0 0.0
        %836 = vmatpush2.msra.mxu0 0.0
        %837 = vmatprep.subr.mxu0 0.0
        %838 = vmatpush2.msra.mxu0 0.0
        %839 = vmatprep.subr.mxu0 0.0
        %840 = vmatpush2.msra.mxu0 0.0
        %841 = vmatprep.subr.mxu0 0.0
        %842 = vmatpush2.msra.mxu0 0.0
        %843 = vmatprep.mubr.f32.mxu0 0.0
        %844 = vmatmul.mubr.f32.gmra.mxu0 %v771
        %v845 = vpop.f32.mrf.mxu0
        %v846 = vadd.f32 %v757, %v845
        %v847 = vpop.f32.mrf.mxu0
        %848 = vmatprep.mubr.f32.mxu0 0.0
        %849 = vmatmul.mubr.f32.gmra.mxu0 %v774
        %v850 = vpop.f32.mrf.mxu0
        %v851 = vadd.f32 %v762, %v850
        %v852 = vpop.f32.mrf.mxu0
        %853 = vmatprep.mubr.f32.mxu0 0.0
        %854 = vmatmul.mubr.f32.gmra.mxu0 %v777
        %v855 = vpop.f32.mrf.mxu0
        %v856 = vadd.f32 %v767, %v855
        %v857 = vpop.f32.mrf.mxu0
        %858 = vdwg.mxu0
        %v859 = vld [vmem:[#allocation2 + $0x2] sm:$0xff]
        %v860 = vld [vmem:[#allocation2 + $0xa] sm:$0xff]
        %v861 = vld [vmem:[#allocation2 + $0x12] sm:$0xff]
        %s862 = scalar_lea.vmem %s5, 16
        %v863 = vld [vmem:[%s862] sm:$0xff]
        %v865 = vsel %vm668, %v859, 0
        %v868 = vsel %vm668, %v860, 0
        %v871 = vsel %vm668, %v861, 0
        %873 = vmatprep.subr.mxu0 0.0
        %874 = vmatpush1.msra.mxu0 0.0
        %875 = vmatprep.subr.mxu0 0.0
        %876 = vmatpush1.msra.mxu0 0.0
        %877 = vmatprep.subr.mxu0 0.0
        %878 = vmatpush1.msra.mxu0 0.0
        %879 = vmatprep.subr.mxu0 0.0
        %880 = vmatpush1.msra.mxu0 0.0
        %881 = vmatprep.subr.mxu0 0.0
        %882 = vmatpush1.msra.mxu0 0.0
        %883 = vmatprep.subr.mxu0 0.0
        %884 = vmatpush1.msra.mxu0 0.0
        %885 = vmatprep.subr.mxu0 0.0
        %886 = vmatpush1.msra.mxu0 0.0
        %887 = vmatprep.subr.mxu0 0.0
        %888 = vmatpush1.msra.mxu0 0.0
        %889 = vmatprep.subr.mxu0 0.0
        %890 = vmatpush1.msra.mxu0 0.0
        %891 = vmatprep.subr.mxu0 0.0
        %892 = vmatpush1.msra.mxu0 0.0
        %893 = vmatprep.subr.mxu0 0.0
        %894 = vmatpush1.msra.mxu0 0.0
        %895 = vmatprep.subr.mxu0 0.0
        %896 = vmatpush1.msra.mxu0 0.0
        %897 = vmatprep.subr.mxu0 0.0
        %898 = vmatpush1.msra.mxu0 0.0
        %899 = vmatprep.subr.mxu0 0.0
        %900 = vmatpush1.msra.mxu0 0.0
        %901 = vmatprep.subr.mxu0 0.0
        %902 = vmatpush1.msra.mxu0 0.0
        %903 = vmatprep.subr.mxu0 0.0
        %904 = vmatpush1.msra.mxu0 %v863
        %905 = vmatprep.subr.mxu0 0.0
        %906 = vmatpush2.msra.mxu0 0.0
        %907 = vmatprep.subr.mxu0 0.0
        %908 = vmatpush2.msra.mxu0 0.0
        %909 = vmatprep.subr.mxu0 0.0
        %910 = vmatpush2.msra.mxu0 0.0
        %911 = vmatprep.subr.mxu0 0.0
        %912 = vmatpush2.msra.mxu0 0.0
        %913 = vmatprep.subr.mxu0 0.0
        %914 = vmatpush2.msra.mxu0 0.0
        %915 = vmatprep.subr.mxu0 0.0
        %916 = vmatpush2.msra.mxu0 0.0
        %917 = vmatprep.subr.mxu0 0.0
        %918 = vmatpush2.msra.mxu0 0.0
        %919 = vmatprep.subr.mxu0 0.0
        %920 = vmatpush2.msra.mxu0 0.0
        %921 = vmatprep.subr.mxu0 0.0
        %922 = vmatpush2.msra.mxu0 0.0
        %923 = vmatprep.subr.mxu0 0.0
        %924 = vmatpush2.msra.mxu0 0.0
        %925 = vmatprep.subr.mxu0 0.0
        %926 = vmatpush2.msra.mxu0 0.0
        %927 = vmatprep.subr.mxu0 0.0
        %928 = vmatpush2.msra.mxu0 0.0
        %929 = vmatprep.subr.mxu0 0.0
        %930 = vmatpush2.msra.mxu0 0.0
        %931 = vmatprep.subr.mxu0 0.0
        %932 = vmatpush2.msra.mxu0 0.0
        %933 = vmatprep.subr.mxu0 0.0
        %934 = vmatpush2.msra.mxu0 0.0
        %935 = vmatprep.subr.mxu0 0.0
        %936 = vmatpush2.msra.mxu0 0.0
        %937 = vmatprep.mubr.f32.mxu0 0.0
        %938 = vmatmul.mubr.f32.gmra.mxu0 %v865
        %v939 = vpop.f32.mrf.mxu0
        %v940 = vadd.f32 0.0, %v939
        %v941 = vpop.f32.mrf.mxu0
        %942 = vmatprep.mubr.f32.mxu0 0.0
        %943 = vmatmul.mubr.f32.gmra.mxu0 %v868
        %v944 = vpop.f32.mrf.mxu0
        %v945 = vadd.f32 0.0, %v944
        %v946 = vpop.f32.mrf.mxu0
        %947 = vmatprep.mubr.f32.mxu0 0.0
        %948 = vmatmul.mubr.f32.gmra.mxu0 %v871
        %v949 = vpop.f32.mrf.mxu0
        %v950 = vadd.f32 0.0, %v949
        %v951 = vpop.f32.mrf.mxu0
        %952 = vdwg.mxu0
        %v953 = vadd.f32 %v846, %v940
        %v954 = vadd.f32 %v851, %v945
        %v955 = vadd.f32 %v856, %v950
        %v956 = vld [vmem:[%s6] sm:$0x1]
        %v958 = vlaneseq
        %v959 = vshrl.u32 %v958, 7
        %v960 = vsub.s32 0, %v959
        %v961 = vrot.slane %v956, %v960
        %v963 = vadd.f32 %v953, %v961
        %v964 = vadd.f32 %v954, %v961
        %v965 = vadd.f32 %v955, %v961
        %v966 = vld [vmem:[%s7] sm:$0xf]
        %v967 = vld [vmem:[%s8] sm:$0x1]
        %v969 = vlaneseq
        %v970 = vshrl.u32 %v969, 7
        %v971 = vsub.s32 0, %v970
        %v972 = vrot.slane %v967, %v971
        %v975 = vsel %vm353, %v966, 0
        %977 = vmatprep.subr.mxu0 0.0
        %978 = vmatpush1.msra.mxu0 0.0
        %979 = vmatprep.subr.mxu0 0.0
        %980 = vmatpush1.msra.mxu0 0.0
        %981 = vmatprep.subr.mxu0 0.0
        %982 = vmatpush1.msra.mxu0 0.0
        %983 = vmatprep.subr.mxu0 0.0
        %984 = vmatpush1.msra.mxu0 0.0
        %985 = vmatprep.subr.mxu0 0.0
        %986 = vmatpush1.msra.mxu0 0.0
        %987 = vmatprep.subr.mxu0 0.0
        %988 = vmatpush1.msra.mxu0 0.0
        %989 = vmatprep.subr.mxu0 0.0
        %990 = vmatpush1.msra.mxu0 0.0
        %991 = vmatprep.subr.mxu0 0.0
        %992 = vmatpush1.msra.mxu0 0.0
        %993 = vmatprep.subr.mxu0 0.0
        %994 = vmatpush1.msra.mxu0 0.0
        %995 = vmatprep.subr.mxu0 0.0
        %996 = vmatpush1.msra.mxu0 0.0
        %997 = vmatprep.subr.mxu0 0.0
        %998 = vmatpush1.msra.mxu0 0.0
        %999 = vmatprep.subr.mxu0 0.0
        %1000 = vmatpush1.msra.mxu0 0.0
        %1001 = vmatprep.subr.mxu0 0.0
        %1002 = vmatpush1.msra.mxu0 0.0
        %1003 = vmatprep.subr.mxu0 0.0
        %1004 = vmatpush1.msra.mxu0 0.0
        %1005 = vmatprep.subr.mxu0 0.0
        %1006 = vmatpush1.msra.mxu0 0.0
        %1007 = vmatprep.subr.mxu0 0.0
        %1008 = vmatpush1.msra.mxu0 %v975
        %1009 = vmatprep.subr.mxu0 0.0
        %1010 = vmatpush2.msra.mxu0 0.0
        %1011 = vmatprep.subr.mxu0 0.0
        %1012 = vmatpush2.msra.mxu0 0.0
        %1013 = vmatprep.subr.mxu0 0.0
        %1014 = vmatpush2.msra.mxu0 0.0
        %1015 = vmatprep.subr.mxu0 0.0
        %1016 = vmatpush2.msra.mxu0 0.0
        %1017 = vmatprep.subr.mxu0 0.0
        %1018 = vmatpush2.msra.mxu0 0.0
        %1019 = vmatprep.subr.mxu0 0.0
        %1020 = vmatpush2.msra.mxu0 0.0
        %1021 = vmatprep.subr.mxu0 0.0
        %1022 = vmatpush2.msra.mxu0 0.0
        %1023 = vmatprep.subr.mxu0 0.0
        %1024 = vmatpush2.msra.mxu0 0.0
        %1025 = vmatprep.subr.mxu0 0.0
        %1026 = vmatpush2.msra.mxu0 0.0
        %1027 = vmatprep.subr.mxu0 0.0
        %1028 = vmatpush2.msra.mxu0 0.0
        %1029 = vmatprep.subr.mxu0 0.0
        %1030 = vmatpush2.msra.mxu0 0.0
        %1031 = vmatprep.subr.mxu0 0.0
        %1032 = vmatpush2.msra.mxu0 0.0
        %1033 = vmatprep.subr.mxu0 0.0
        %1034 = vmatpush2.msra.mxu0 0.0
        %1035 = vmatprep.subr.mxu0 0.0
        %1036 = vmatpush2.msra.mxu0 0.0
        %1037 = vmatprep.subr.mxu0 0.0
        %1038 = vmatpush2.msra.mxu0 0.0
        %1039 = vmatprep.subr.mxu0 0.0
        %1040 = vmatpush2.msra.mxu0 0.0
        %1041 = vmatprep.mubr.f32.mxu0 0.0
        %1042 = vmatmul.mubr.f32.gmra.mxu0 %v345
        %v1043 = vpop.f32.mrf.mxu0
        %v1044 = vadd.f32 %v972, %v1043
        %v1045 = vpop.f32.mrf.mxu0
        %1046 = vmatprep.mubr.f32.mxu0 0.0
        %1047 = vmatmul.mubr.f32.gmra.mxu0 %v348
        %v1048 = vpop.f32.mrf.mxu0
        %v1049 = vadd.f32 %v972, %v1048
        %v1050 = vpop.f32.mrf.mxu0
        %1051 = vmatprep.mubr.f32.mxu0 0.0
        %1052 = vmatmul.mubr.f32.gmra.mxu0 %v351
        %v1053 = vpop.f32.mrf.mxu0
        %v1054 = vadd.f32 %v972, %v1053
        %v1055 = vpop.f32.mrf.mxu0
        %1056 = vdwg.mxu0
        %v1057 = vadd.f32 %v963, %v1044
        %v1058 = vadd.f32 %v964, %v1049
        %v1059 = vadd.f32 %v965, %v1054
        %1060 = vst.msk [vmem:[#allocation2] sm:$0xff] %vm668, %v1057
        %1061 = vst.msk [vmem:[#allocation2 + $0x8] sm:$0xff] %vm668, %v1058
        %1062 = vst.msk [vmem:[#allocation2 + $0x10] sm:$0xff] %vm668, %v1059
        %v1063 = vld [vmem:[#allocation2] ss:$3 sm:$0xff]
        %s1064 = scalar_lea.vmem [#allocation2], 1
        %v1065 = vld [vmem:[%s1064] ss:$3 sm:$0xff]
        %v1066 = vmax.f32 %v1063, %v1065
        %s1067 = scalar_lea.vmem [#allocation2], 2
        %v1068 = vld [vmem:[%s1067] ss:$3 sm:$0xff]
        %v1069 = vmax.f32 %v1066, %v1068
        %1070 = vst.msk [vmem:[%s325] sm:$0xff] %vm668, %v1069
        %s1071 = sand.u32 %s225, 1
        %s1072 = scalar_lea.sflag [#allocation4], %s1071
        %s1073 = sand.u32 %s225, 1
        %s1074 = smul.addr %s1073, 8
        %s1075 = scalar_lea.vmem [#allocation3], %s1074
        // Predicated region
        $region57: #{tpu_custom_call.1} parent=55 // pred_check
          %p1076 = pneg %p235
        $region58: #{tpu_custom_call.1} parent=55 // pred_check_branch
          %1078 = sbr.rel (%p1076) target = $region60
        $region59: #{tpu_custom_call.1} parent=55 // pred_region
          %s1080 = ssub.s32 128, 128
          %1081 = vsyncadd %s1072, %s1080
          %s1082 = smul.addr %s23, 128
          %s1083 = scalar_lea.hbm %s9, %s1082
          %s1085 = sshll.u32 %s1075, 4
          %s1086 = int_to_ptr.vmem [resolvable:$true] %s1085
          %1088 = dma.vmem_to_hbm [thread:$0]  %s1086, 128, %s1083, %s1072
        $region60: #{tpu_custom_call.1} parent=55 // pred_fallthru
          _
      $region56: #{tpu_custom_call.1} parent=5 // pred_fallthru
        _
      %p1089 = scmp.le.s32.totalorder 2, %s18
      // Predicated region
      $region61: #{tpu_custom_call.1} parent=5 // pred_check
        %p1090 = pneg %p1089
      $region62: #{tpu_custom_call.1} parent=5 // pred_check_branch
        %1092 = sbr.rel (%p1090) target = $region64
      $region63: #{tpu_custom_call.1} parent=5 // pred_region
        %s1093 = ssub.s32 %s18, 2
        // Predicated region
        $region65: #{tpu_custom_call.1} parent=63 // pred_check
          %p1094 = pneg %p241
        $region66: #{tpu_custom_call.1} parent=63 // pred_check_branch
          %1096 = sbr.rel (%p1094) target = $region68
        $region67: #{tpu_custom_call.1} parent=63 // pred_region
          %s1097 = sand.u32 %s226, 1
          %s1098 = scalar_lea.sflag [#allocation4], %s1097
          %s1099 = sand.u32 %s226, 1
          %s1100 = smul.addr %s1099, 8
          %s1101 = scalar_lea.vmem [#allocation3], %s1100
          %1102 = dma.done %s1098, 128
        $region68: #{tpu_custom_call.1} parent=63 // pred_fallthru
          _
      $region64: #{tpu_custom_call.1} parent=5 // pred_fallthru
        _
    $region6: #{tpu_custom_call.1} parent=1 // loop_footer
      %s22 = sadd.s32 1, %s18
    $region7: #{tpu_custom_call.1} parent=1 // loop_footer_branch
      %17 = sbr.rel target = $region3
    $region8: #{tpu_custom_call.1} parent=1 // loop_exit
      _
    %1103 = vsyncpa [#allocation4], 1
    %s1104 = scalar_lea.sflag [#allocation4], 1
    %1105 = vsyncpa %s1104, 1

</llo_original>
